<compile_context>
chip_gen: v7x
topology: tpu7x:2x2x1
jax: 0.10.0
libtpu: 0.0.40
codegen_flags: <defaults>
</compile_context>

<pallas_src>
import functools
import math

import jax
import jax.numpy as jnp
from jax.experimental import pallas as pl
from jax.experimental.pallas import tpu as pltpu


def _fused_conv_kernel(x_ref, w_ref, b_ref, o_ref, patch_ref, *,
                       c_in, kh, kw, wp, rows_per_tile, tiled, apply_relu):
    """One (batch, row-tile) step of the reflection-padded conv.

    x_ref:     (C, L)   flat padded image of one batch element, L = (HP+1)*WP
    w_ref:     (OC, K)  weights, K = C*KH*KW
    b_ref:     (OC, 1)  bias (f32)
    o_ref:     (OC, TM) dense stride-1 "wide" output tile, TM = TH*WP
    patch_ref: (K, TM)  im2col scratch (VMEM)
    """
    tm = rows_per_tile * wp
    halo = (kh - 1) * wp + (kw - 1)

    # Build the im2col matrix: every tap is a contiguous 1-D slice of the flat
    # channel, so no lane-compaction / reshape relayouts are needed.
    for c in range(c_in):
        if tiled:
            # Dynamic but tile-aligned (TM % 128 == 0) window for this row
            # tile; loaded once per channel, taps are static slices of it.
            row0 = pl.multiple_of(pl.program_id(1) * tm, 128)
            win = x_ref[c, pl.ds(row0, tm + halo)]
        for ky in range(kh):
            for kx in range(kw):
                off = ky * wp + kx
                k = (c * kh + ky) * kw + kx
                if tiled:
                    patch_ref[k, :] = win[off:off + tm]
                else:
                    patch_ref[k, :] = x_ref[c, off:off + tm]

    # Single MXU contraction over K = C*KH*KW, f32 accumulation.
    acc = jnp.dot(w_ref[...], patch_ref[...],
                  preferred_element_type=jnp.float32)          # (OC, TM)
    acc = acc + b_ref[...]                                     # (OC, 1) bcast
    if apply_relu:
        acc = jnp.maximum(acc, 0.0)
    o_ref[...] = acc.astype(o_ref.dtype)


def con_layer_forward(x_nchw, weight_oihw, bias, *, stride, is_last,
                      compute_dtype=jnp.float32, rows_per_tile=None):
    """ConLayer forward: reflection pad -> conv2d -> relu (if not last)."""
    n, c_in, h, w = x_nchw.shape
    oc, w_cin, kh, kw = weight_oihw.shape
    assert kh == kw and w_cin == c_in
    pad = kh // 2                           # floor(kernel_size / 2)

    # Reflection pad in NCHW (matches nn.ReflectionPad2d); no layout transpose.
    x_pad = jnp.pad(x_nchw, ((0, 0), (0, 0), (pad, pad), (pad, pad)),
                    mode="reflect")
    hp, wp = h + 2 * pad, w + 2 * pad
    oh_dense = hp - kh + 1                  # dense (stride-1) output rows
    oh = (hp - kh) // stride + 1
    ow = (wp - kw) // stride + 1

    # Flatten spatial per channel + one extra zero row so every contiguous tap
    # window stays in bounds.  (XLA fuses pad + pad + reshape.)
    x_flat = jnp.pad(x_pad, ((0, 0), (0, 0), (0, 1), (0, 0)))
    x_flat = x_flat.reshape(n, c_in, (hp + 1) * wp)
    l_flat = (hp + 1) * wp

    cdt = jnp.dtype(compute_dtype)
    out_dtype = x_nchw.dtype
    x_flat = x_flat.astype(cdt)
    k_dim = c_in * kh * kw
    w2d = weight_oihw.reshape(oc, k_dim).astype(cdt)   # k = (c*kh + ky)*kw + kx
    b2d = bias.reshape(oc, 1).astype(jnp.float32)

    in_it = cdt.itemsize
    out_it = jnp.dtype(out_dtype).itemsize

    def step_bytes(th):
        tm_ = th * wp
        return (2 * c_in * l_flat * in_it          # resident image (2 buffers)
                + 2 * oc * k_dim * in_it + 2 * oc * 4
                + 2 * oc * tm_ * out_it            # output block (2 buffers)
                + k_dim * tm_ * in_it              # im2col scratch
                + oc * tm_ * 4)                    # f32 accumulator value

    # Generation-aware VMEM budget / limit (128 MiB on v5e/v6e, 64 MiB on v7x).
    try:
        vmem_cap = int(pltpu.get_tpu_info().vmem_capacity_bytes)
    except Exception:
        vmem_cap = 64 * 2**20
    budget = int(vmem_cap * 0.7)

    # Choose rows-per-tile TH over the dense output rows.
    if rows_per_tile is not None:
        th = int(rows_per_tile)
        assert oh_dense % th == 0
    elif step_bytes(oh_dense) <= budget:
        th = oh_dense                              # whole image in one tile
    else:
        th = None
        for cand in range(oh_dense - 1, 0, -1):
            if (oh_dense % cand == 0 and (cand * wp) % 128 == 0
                    and step_bytes(cand) <= budget):
                th = cand
                break
        if th is None:
            # TODO(synk): haloed input tiling via pl.ANY + make_async_copy.
            th = oh_dense
    n_tiles = oh_dense // th
    if n_tiles > 1:
        assert (th * wp) % 128 == 0, "row tiles must keep output blocks lane-aligned"
    tm = th * wp
    m_wide = oh_dense * wp

    vmem_limit = int(min(max(step_bytes(th) + (8 << 20), 32 << 20),
                         int(vmem_cap * 0.9)))

    kernel = functools.partial(
        _fused_conv_kernel, c_in=c_in, kh=kh, kw=kw, wp=wp,
        rows_per_tile=th, tiled=(n_tiles > 1), apply_relu=(not is_last))

    cost = pl.CostEstimate(
        flops=int(2 * n * m_wide * k_dim * oc),
        transcendentals=0,
        bytes_accessed=int(x_flat.size * in_it + w2d.size * in_it
                           + b2d.size * 4 + n * oc * m_wide * out_it),
    )

    out_wide = pl.pallas_call(
        kernel,
        out_shape=jax.ShapeDtypeStruct((n, oc, m_wide), out_dtype),
        grid_spec=pltpu.PrefetchScalarGridSpec(
            num_scalar_prefetch=0,
            grid=(n, n_tiles),
            in_specs=[
                # whole flat image per batch element, resident across row tiles
                pl.BlockSpec((None, c_in, l_flat), lambda b, t: (b, 0, 0)),
                pl.BlockSpec((oc, k_dim), lambda b, t: (0, 0)),
                pl.BlockSpec((oc, 1), lambda b, t: (0, 0)),
            ],
            out_specs=pl.BlockSpec((None, oc, tm), lambda b, t: (b, 0, t)),
            scratch_shapes=[pltpu.VMEM((k_dim, tm), cdt)],
        ),
        compiler_params=pltpu.CompilerParams(
            dimension_semantics=("parallel", "arbitrary"),
            vmem_limit_bytes=vmem_limit,
        ),
        cost_estimate=cost,
    )(x_flat, w2d, b2d)

    # Free reshape to (N, OC, dense rows, WP); drop the kw-1 invalid columns
    # per row and (for stride>1) the skipped rows/cols.  NCHW already.
    out = out_wide.reshape(n, oc, oh_dense, wp)
    out = out[:, :, :(oh - 1) * stride + 1:stride, :(ow - 1) * stride + 1:stride]
    return out


def _reference_forward(x_nchw, weight_oihw, bias, *, stride, is_last):
    """Pure-JAX reference (reflection pad + lax conv) for the correctness check."""
    ksize = weight_oihw.shape[-1]
    pad = ksize // 2
    x_pad = jnp.pad(x_nchw, ((0, 0), (0, 0), (pad, pad), (pad, pad)),
                    mode="reflect")
    out = jax.lax.conv_general_dilated(
        x_pad, weight_oihw, window_strides=(stride, stride), padding="VALID",
        dimension_numbers=("NCHW", "OIHW", "NCHW"))
    out = out + bias.reshape(1, -1, 1, 1)
    if not is_last:
        out = jnp.maximum(out, 0.0)
    return out


if __name__ == "__main__":
    key = jax.random.PRNGKey(0)
    k_x, k_w, k_b = jax.random.split(key, 3)

    # small shapes consistent with the module
    batch, in_channels, spatial = 2, 4, 16
    out_channels, kernel_size = 8, 3

    x = jax.random.normal(
        k_x, (batch, in_channels, spatial, spatial), dtype=jnp.float32)

    # deterministic PyTorch-style (kaiming-uniform-ish) init
    fan_in = in_channels * kernel_size * kernel_size
    bound = 1.0 / math.sqrt(fan_in)
    weight = jax.random.uniform(
        k_w, (out_channels, in_channels, kernel_size, kernel_size),
        minval=-bound, maxval=bound, dtype=jnp.float32)
    bias = jax.random.uniform(
        k_b, (out_channels,), minval=-bound, maxval=bound, dtype=jnp.float32)

    for stride, is_last in ((1, False), (1, True), (2, False)):
        out = jax.block_until_ready(
            con_layer_forward(x, weight, bias, stride=stride, is_last=is_last))
        ref = jax.block_until_ready(
            _reference_forward(x, weight, bias, stride=stride, is_last=is_last))
        assert out.shape == ref.shape, (stride, is_last, out.shape, ref.shape)
        assert jnp.allclose(out, ref, atol=1e-4, rtol=1e-4), (
            "mismatch vs reference", stride, is_last)

    print("KERNEL_OK")
</pallas_src>

<mosaic_0001>
module attributes {stable_mosaic.version = 11 : i64} {
  func.func @_fused_conv_kernel(%arg0: i32, %arg1: i32, %arg2: memref<1x4x342xf32, #tpu.memory_space<vmem>>, %arg3: memref<8x36xf32, #tpu.memory_space<vmem>>, %arg4: memref<8x1xf32, #tpu.memory_space<vmem>>, %arg5: memref<1x8x288xf32, #tpu.memory_space<vmem>>, %arg6: memref<36x288xf32, #tpu.memory_space<vmem>>) attributes {dimension_semantics = [#tpu.dimension_semantics<parallel>, #tpu.dimension_semantics<arbitrary>], iteration_bounds = array<i64: 2, 1>, scalar_prefetch = 0 : i64, scratch_operands = 1 : i64, tpu.core_type = #tpu.core_type<tc>, window_params = [{transform_indices = @transform_0, window_bounds = array<i64: 1, 4, 342>}, {pipeline_mode = #tpu.pipeline_mode<synchronous>, transform_indices = @transform_1, window_bounds = array<i64: 8, 36>}, {pipeline_mode = #tpu.pipeline_mode<synchronous>, transform_indices = @transform_2, window_bounds = array<i64: 8, 1>}, {transform_indices = @transform_3, window_bounds = array<i64: 1, 8, 288>}]} {
    %c0 = arith.constant 0 : index
    %c0_0 = arith.constant 0 : index
    %c0_1 = arith.constant 0 : index
    %0 = vector.load %arg2[%c0, %c0_0, %c0_1] : memref<1x4x342xf32, #tpu.memory_space<vmem>>, vector<1x1x288xf32>
    %1 = vector.shape_cast %0 : vector<1x1x288xf32> to vector<288xf32>
    %c0_2 = arith.constant 0 : index
    %c0_3 = arith.constant 0 : index
    %2 = vector.load %arg6[%c0_2, %c0_3] : memref<36x288xf32, #tpu.memory_space<vmem>>, vector<1x288xf32>
    %3 = vector.shape_cast %2 : vector<1x288xf32> to vector<288xf32>
    %4 = vector.shape_cast %1 : vector<288xf32> to vector<1x288xf32>
    tpu.vector_store %arg6[%c0_2, %c0_3], %4 {strides = array<i32>} : memref<36x288xf32, #tpu.memory_space<vmem>>, vector<1x288xf32>,
    %c0_4 = arith.constant 0 : index
    %c0_5 = arith.constant 0 : index
    %c1 = arith.constant 1 : index
    %5 = vector.load %arg2[%c0_4, %c0_5, %c1] : memref<1x4x342xf32, #tpu.memory_space<vmem>>, vector<1x1x288xf32>
    %6 = vector.shape_cast %5 : vector<1x1x288xf32> to vector<288xf32>
    %c1_6 = arith.constant 1 : index
    %c0_7 = arith.constant 0 : index
    %7 = vector.load %arg6[%c1_6, %c0_7] : memref<36x288xf32, #tpu.memory_space<vmem>>, vector<1x288xf32>
    %8 = vector.shape_cast %7 : vector<1x288xf32> to vector<288xf32>
    %9 = vector.shape_cast %6 : vector<288xf32> to vector<1x288xf32>
    tpu.vector_store %arg6[%c1_6, %c0_7], %9 {strides = array<i32>} : memref<36x288xf32, #tpu.memory_space<vmem>>, vector<1x288xf32>,
    %c0_8 = arith.constant 0 : index
    %c0_9 = arith.constant 0 : index
    %c2 = arith.constant 2 : index
    %10 = vector.load %arg2[%c0_8, %c0_9, %c2] : memref<1x4x342xf32, #tpu.memory_space<vmem>>, vector<1x1x288xf32>
    %11 = vector.shape_cast %10 : vector<1x1x288xf32> to vector<288xf32>
    %c2_10 = arith.constant 2 : index
    %c0_11 = arith.constant 0 : index
    %12 = vector.load %arg6[%c2_10, %c0_11] : memref<36x288xf32, #tpu.memory_space<vmem>>, vector<1x288xf32>
    %13 = vector.shape_cast %12 : vector<1x288xf32> to vector<288xf32>
    %14 = vector.shape_cast %11 : vector<288xf32> to vector<1x288xf32>
    tpu.vector_store %arg6[%c2_10, %c0_11], %14 {strides = array<i32>} : memref<36x288xf32, #tpu.memory_space<vmem>>, vector<1x288xf32>,
    %c0_12 = arith.constant 0 : index
    %c0_13 = arith.constant 0 : index
    %c18 = arith.constant 18 : index
    %15 = vector.load %arg2[%c0_12, %c0_13, %c18] : memref<1x4x342xf32, #tpu.memory_space<vmem>>, vector<1x1x288xf32>
    %16 = vector.shape_cast %15 : vector<1x1x288xf32> to vector<288xf32>
    %c3 = arith.constant 3 : index
    %c0_14 = arith.constant 0 : index
    %17 = vector.load %arg6[%c3, %c0_14] : memref<36x288xf32, #tpu.memory_space<vmem>>, vector<1x288xf32>
    %18 = vector.shape_cast %17 : vector<1x288xf32> to vector<288xf32>
    %19 = vector.shape_cast %16 : vector<288xf32> to vector<1x288xf32>
    tpu.vector_store %arg6[%c3, %c0_14], %19 {strides = array<i32>} : memref<36x288xf32, #tpu.memory_space<vmem>>, vector<1x288xf32>,
    %c0_15 = arith.constant 0 : index
    %c0_16 = arith.constant 0 : index
    %c19 = arith.constant 19 : index
    %20 = vector.load %arg2[%c0_15, %c0_16, %c19] : memref<1x4x342xf32, #tpu.memory_space<vmem>>, vector<1x1x288xf32>
    %21 = vector.shape_cast %20 : vector<1x1x288xf32> to vector<288xf32>
    %c4 = arith.constant 4 : index
    %c0_17 = arith.constant 0 : index
    %22 = vector.load %arg6[%c4, %c0_17] : memref<36x288xf32, #tpu.memory_space<vmem>>, vector<1x288xf32>
    %23 = vector.shape_cast %22 : vector<1x288xf32> to vector<288xf32>
    %24 = vector.shape_cast %21 : vector<288xf32> to vector<1x288xf32>
    tpu.vector_store %arg6[%c4, %c0_17], %24 {strides = array<i32>} : memref<36x288xf32, #tpu.memory_space<vmem>>, vector<1x288xf32>,
    %c0_18 = arith.constant 0 : index
    %c0_19 = arith.constant 0 : index
    %c20 = arith.constant 20 : index
    %25 = vector.load %arg2[%c0_18, %c0_19, %c20] : memref<1x4x342xf32, #tpu.memory_space<vmem>>, vector<1x1x288xf32>
    %26 = vector.shape_cast %25 : vector<1x1x288xf32> to vector<288xf32>
    %c5 = arith.constant 5 : index
    %c0_20 = arith.constant 0 : index
    %27 = vector.load %arg6[%c5, %c0_20] : memref<36x288xf32, #tpu.memory_space<vmem>>, vector<1x288xf32>
    %28 = vector.shape_cast %27 : vector<1x288xf32> to vector<288xf32>
    %29 = vector.shape_cast %26 : vector<288xf32> to vector<1x288xf32>
    tpu.vector_store %arg6[%c5, %c0_20], %29 {strides = array<i32>} : memref<36x288xf32, #tpu.memory_space<vmem>>, vector<1x288xf32>,
    %c0_21 = arith.constant 0 : index
    %c0_22 = arith.constant 0 : index
    %c36 = arith.constant 36 : index
    %30 = vector.load %arg2[%c0_21, %c0_22, %c36] : memref<1x4x342xf32, #tpu.memory_space<vmem>>, vector<1x1x288xf32>
    %31 = vector.shape_cast %30 : vector<1x1x288xf32> to vector<288xf32>
    %c6 = arith.constant 6 : index
    %c0_23 = arith.constant 0 : index
    %32 = vector.load %arg6[%c6, %c0_23] : memref<36x288xf32, #tpu.memory_space<vmem>>, vector<1x288xf32>
    %33 = vector.shape_cast %32 : vector<1x288xf32> to vector<288xf32>
    %34 = vector.shape_cast %31 : vector<288xf32> to vector<1x288xf32>
    tpu.vector_store %arg6[%c6, %c0_23], %34 {strides = array<i32>} : memref<36x288xf32, #tpu.memory_space<vmem>>, vector<1x288xf32>,
    %c0_24 = arith.constant 0 : index
    %c0_25 = arith.constant 0 : index
    %c37 = arith.constant 37 : index
    %35 = vector.load %arg2[%c0_24, %c0_25, %c37] : memref<1x4x342xf32, #tpu.memory_space<vmem>>, vector<1x1x288xf32>
    %36 = vector.shape_cast %35 : vector<1x1x288xf32> to vector<288xf32>
    %c7 = arith.constant 7 : index
    %c0_26 = arith.constant 0 : index
    %37 = vector.load %arg6[%c7, %c0_26] : memref<36x288xf32, #tpu.memory_space<vmem>>, vector<1x288xf32>
    %38 = vector.shape_cast %37 : vector<1x288xf32> to vector<288xf32>
    %39 = vector.shape_cast %36 : vector<288xf32> to vector<1x288xf32>
    tpu.vector_store %arg6[%c7, %c0_26], %39 {strides = array<i32>} : memref<36x288xf32, #tpu.memory_space<vmem>>, vector<1x288xf32>,
    %c0_27 = arith.constant 0 : index
    %c0_28 = arith.constant 0 : index
    %c38 = arith.constant 38 : index
    %40 = vector.load %arg2[%c0_27, %c0_28, %c38] : memref<1x4x342xf32, #tpu.memory_space<vmem>>, vector<1x1x288xf32>
    %41 = vector.shape_cast %40 : vector<1x1x288xf32> to vector<288xf32>
    %c8 = arith.constant 8 : index
    %c0_29 = arith.constant 0 : index
    %42 = vector.load %arg6[%c8, %c0_29] : memref<36x288xf32, #tpu.memory_space<vmem>>, vector<1x288xf32>
    %43 = vector.shape_cast %42 : vector<1x288xf32> to vector<288xf32>
    %44 = vector.shape_cast %41 : vector<288xf32> to vector<1x288xf32>
    tpu.vector_store %arg6[%c8, %c0_29], %44 {strides = array<i32>} : memref<36x288xf32, #tpu.memory_space<vmem>>, vector<1x288xf32>,
    %c0_30 = arith.constant 0 : index
    %c1_31 = arith.constant 1 : index
    %c0_32 = arith.constant 0 : index
    %45 = vector.load %arg2[%c0_30, %c1_31, %c0_32] : memref<1x4x342xf32, #tpu.memory_space<vmem>>, vector<1x1x288xf32>
    %46 = vector.shape_cast %45 : vector<1x1x288xf32> to vector<288xf32>
    %c9 = arith.constant 9 : index
    %c0_33 = arith.constant 0 : index
    %47 = vector.load %arg6[%c9, %c0_33] : memref<36x288xf32, #tpu.memory_space<vmem>>, vector<1x288xf32>
    %48 = vector.shape_cast %47 : vector<1x288xf32> to vector<288xf32>
    %49 = vector.shape_cast %46 : vector<288xf32> to vector<1x288xf32>
    tpu.vector_store %arg6[%c9, %c0_33], %49 {strides = array<i32>} : memref<36x288xf32, #tpu.memory_space<vmem>>, vector<1x288xf32>,
    %c0_34 = arith.constant 0 : index
    %c1_35 = arith.constant 1 : index
    %c1_36 = arith.constant 1 : index
    %50 = vector.load %arg2[%c0_34, %c1_35, %c1_36] : memref<1x4x342xf32, #tpu.memory_space<vmem>>, vector<1x1x288xf32>
    %51 = vector.shape_cast %50 : vector<1x1x288xf32> to vector<288xf32>
    %c10 = arith.constant 10 : index
    %c0_37 = arith.constant 0 : index
    %52 = vector.load %arg6[%c10, %c0_37] : memref<36x288xf32, #tpu.memory_space<vmem>>, vector<1x288xf32>
    %53 = vector.shape_cast %52 : vector<1x288xf32> to vector<288xf32>
    %54 = vector.shape_cast %51 : vector<288xf32> to vector<1x288xf32>
    tpu.vector_store %arg6[%c10, %c0_37], %54 {strides = array<i32>} : memref<36x288xf32, #tpu.memory_space<vmem>>, vector<1x288xf32>,
    %c0_38 = arith.constant 0 : index
    %c1_39 = arith.constant 1 : index
    %c2_40 = arith.constant 2 : index
    %55 = vector.load %arg2[%c0_38, %c1_39, %c2_40] : memref<1x4x342xf32, #tpu.memory_space<vmem>>, vector<1x1x288xf32>
    %56 = vector.shape_cast %55 : vector<1x1x288xf32> to vector<288xf32>
    %c11 = arith.constant 11 : index
    %c0_41 = arith.constant 0 : index
    %57 = vector.load %arg6[%c11, %c0_41] : memref<36x288xf32, #tpu.memory_space<vmem>>, vector<1x288xf32>
    %58 = vector.shape_cast %57 : vector<1x288xf32> to vector<288xf32>
    %59 = vector.shape_cast %56 : vector<288xf32> to vector<1x288xf32>
    tpu.vector_store %arg6[%c11, %c0_41], %59 {strides = array<i32>} : memref<36x288xf32, #tpu.memory_space<vmem>>, vector<1x288xf32>,
    %c0_42 = arith.constant 0 : index
    %c1_43 = arith.constant 1 : index
    %c18_44 = arith.constant 18 : index
    %60 = vector.load %arg2[%c0_42, %c1_43, %c18_44] : memref<1x4x342xf32, #tpu.memory_space<vmem>>, vector<1x1x288xf32>
    %61 = vector.shape_cast %60 : vector<1x1x288xf32> to vector<288xf32>
    %c12 = arith.constant 12 : index
    %c0_45 = arith.constant 0 : index
    %62 = vector.load %arg6[%c12, %c0_45] : memref<36x288xf32, #tpu.memory_space<vmem>>, vector<1x288xf32>
    %63 = vector.shape_cast %62 : vector<1x288xf32> to vector<288xf32>
    %64 = vector.shape_cast %61 : vector<288xf32> to vector<1x288xf32>
    tpu.vector_store %arg6[%c12, %c0_45], %64 {strides = array<i32>} : memref<36x288xf32, #tpu.memory_space<vmem>>, vector<1x288xf32>,
    %c0_46 = arith.constant 0 : index
    %c1_47 = arith.constant 1 : index
    %c19_48 = arith.constant 19 : index
    %65 = vector.load %arg2[%c0_46, %c1_47, %c19_48] : memref<1x4x342xf32, #tpu.memory_space<vmem>>, vector<1x1x288xf32>
    %66 = vector.shape_cast %65 : vector<1x1x288xf32> to vector<288xf32>
    %c13 = arith.constant 13 : index
    %c0_49 = arith.constant 0 : index
    %67 = vector.load %arg6[%c13, %c0_49] : memref<36x288xf32, #tpu.memory_space<vmem>>, vector<1x288xf32>
    %68 = vector.shape_cast %67 : vector<1x288xf32> to vector<288xf32>
    %69 = vector.shape_cast %66 : vector<288xf32> to vector<1x288xf32>
    tpu.vector_store %arg6[%c13, %c0_49], %69 {strides = array<i32>} : memref<36x288xf32, #tpu.memory_space<vmem>>, vector<1x288xf32>,
    %c0_50 = arith.constant 0 : index
    %c1_51 = arith.constant 1 : index
    %c20_52 = arith.constant 20 : index
    %70 = vector.load %arg2[%c0_50, %c1_51, %c20_52] : memref<1x4x342xf32, #tpu.memory_space<vmem>>, vector<1x1x288xf32>
    %71 = vector.shape_cast %70 : vector<1x1x288xf32> to vector<288xf32>
    %c14 = arith.constant 14 : index
    %c0_53 = arith.constant 0 : index
    %72 = vector.load %arg6[%c14, %c0_53] : memref<36x288xf32, #tpu.memory_space<vmem>>, vector<1x288xf32>
    %73 = vector.shape_cast %72 : vector<1x288xf32> to vector<288xf32>
    %74 = vector.shape_cast %71 : vector<288xf32> to vector<1x288xf32>
    tpu.vector_store %arg6[%c14, %c0_53], %74 {strides = array<i32>} : memref<36x288xf32, #tpu.memory_space<vmem>>, vector<1x288xf32>,
    %c0_54 = arith.constant 0 : index
    %c1_55 = arith.constant 1 : index
    %c36_56 = arith.constant 36 : index
    %75 = vector.load %arg2[%c0_54, %c1_55, %c36_56] : memref<1x4x342xf32, #tpu.memory_space<vmem>>, vector<1x1x288xf32>
    %76 = vector.shape_cast %75 : vector<1x1x288xf32> to vector<288xf32>
    %c15 = arith.constant 15 : index
    %c0_57 = arith.constant 0 : index
    %77 = vector.load %arg6[%c15, %c0_57] : memref<36x288xf32, #tpu.memory_space<vmem>>, vector<1x288xf32>
    %78 = vector.shape_cast %77 : vector<1x288xf32> to vector<288xf32>
    %79 = vector.shape_cast %76 : vector<288xf32> to vector<1x288xf32>
    tpu.vector_store %arg6[%c15, %c0_57], %79 {strides = array<i32>} : memref<36x288xf32, #tpu.memory_space<vmem>>, vector<1x288xf32>,
    %c0_58 = arith.constant 0 : index
    %c1_59 = arith.constant 1 : index
    %c37_60 = arith.constant 37 : index
    %80 = vector.load %arg2[%c0_58, %c1_59, %c37_60] : memref<1x4x342xf32, #tpu.memory_space<vmem>>, vector<1x1x288xf32>
    %81 = vector.shape_cast %80 : vector<1x1x288xf32> to vector<288xf32>
    %c16 = arith.constant 16 : index
    %c0_61 = arith.constant 0 : index
    %82 = vector.load %arg6[%c16, %c0_61] : memref<36x288xf32, #tpu.memory_space<vmem>>, vector<1x288xf32>
    %83 = vector.shape_cast %82 : vector<1x288xf32> to vector<288xf32>
    %84 = vector.shape_cast %81 : vector<288xf32> to vector<1x288xf32>
    tpu.vector_store %arg6[%c16, %c0_61], %84 {strides = array<i32>} : memref<36x288xf32, #tpu.memory_space<vmem>>, vector<1x288xf32>,
    %c0_62 = arith.constant 0 : index
    %c1_63 = arith.constant 1 : index
    %c38_64 = arith.constant 38 : index
    %85 = vector.load %arg2[%c0_62, %c1_63, %c38_64] : memref<1x4x342xf32, #tpu.memory_space<vmem>>, vector<1x1x288xf32>
    %86 = vector.shape_cast %85 : vector<1x1x288xf32> to vector<288xf32>
    %c17 = arith.constant 17 : index
    %c0_65 = arith.constant 0 : index
    %87 = vector.load %arg6[%c17, %c0_65] : memref<36x288xf32, #tpu.memory_space<vmem>>, vector<1x288xf32>
    %88 = vector.shape_cast %87 : vector<1x288xf32> to vector<288xf32>
    %89 = vector.shape_cast %86 : vector<288xf32> to vector<1x288xf32>
    tpu.vector_store %arg6[%c17, %c0_65], %89 {strides = array<i32>} : memref<36x288xf32, #tpu.memory_space<vmem>>, vector<1x288xf32>,
    %c0_66 = arith.constant 0 : index
    %c2_67 = arith.constant 2 : index
    %c0_68 = arith.constant 0 : index
    %90 = vector.load %arg2[%c0_66, %c2_67, %c0_68] : memref<1x4x342xf32, #tpu.memory_space<vmem>>, vector<1x1x288xf32>
    %91 = vector.shape_cast %90 : vector<1x1x288xf32> to vector<288xf32>
    %c18_69 = arith.constant 18 : index
    %c0_70 = arith.constant 0 : index
    %92 = vector.load %arg6[%c18_69, %c0_70] : memref<36x288xf32, #tpu.memory_space<vmem>>, vector<1x288xf32>
    %93 = vector.shape_cast %92 : vector<1x288xf32> to vector<288xf32>
    %94 = vector.shape_cast %91 : vector<288xf32> to vector<1x288xf32>
    tpu.vector_store %arg6[%c18_69, %c0_70], %94 {strides = array<i32>} : memref<36x288xf32, #tpu.memory_space<vmem>>, vector<1x288xf32>,
    %c0_71 = arith.constant 0 : index
    %c2_72 = arith.constant 2 : index
    %c1_73 = arith.constant 1 : index
    %95 = vector.load %arg2[%c0_71, %c2_72, %c1_73] : memref<1x4x342xf32, #tpu.memory_space<vmem>>, vector<1x1x288xf32>
    %96 = vector.shape_cast %95 : vector<1x1x288xf32> to vector<288xf32>
    %c19_74 = arith.constant 19 : index
    %c0_75 = arith.constant 0 : index
    %97 = vector.load %arg6[%c19_74, %c0_75] : memref<36x288xf32, #tpu.memory_space<vmem>>, vector<1x288xf32>
    %98 = vector.shape_cast %97 : vector<1x288xf32> to vector<288xf32>
    %99 = vector.shape_cast %96 : vector<288xf32> to vector<1x288xf32>
    tpu.vector_store %arg6[%c19_74, %c0_75], %99 {strides = array<i32>} : memref<36x288xf32, #tpu.memory_space<vmem>>, vector<1x288xf32>,
    %c0_76 = arith.constant 0 : index
    %c2_77 = arith.constant 2 : index
    %c2_78 = arith.constant 2 : index
    %100 = vector.load %arg2[%c0_76, %c2_77, %c2_78] : memref<1x4x342xf32, #tpu.memory_space<vmem>>, vector<1x1x288xf32>
    %101 = vector.shape_cast %100 : vector<1x1x288xf32> to vector<288xf32>
    %c20_79 = arith.constant 20 : index
    %c0_80 = arith.constant 0 : index
    %102 = vector.load %arg6[%c20_79, %c0_80] : memref<36x288xf32, #tpu.memory_space<vmem>>, vector<1x288xf32>
    %103 = vector.shape_cast %102 : vector<1x288xf32> to vector<288xf32>
    %104 = vector.shape_cast %101 : vector<288xf32> to vector<1x288xf32>
    tpu.vector_store %arg6[%c20_79, %c0_80], %104 {strides = array<i32>} : memref<36x288xf32, #tpu.memory_space<vmem>>, vector<1x288xf32>,
    %c0_81 = arith.constant 0 : index
    %c2_82 = arith.constant 2 : index
    %c18_83 = arith.constant 18 : index
    %105 = vector.load %arg2[%c0_81, %c2_82, %c18_83] : memref<1x4x342xf32, #tpu.memory_space<vmem>>, vector<1x1x288xf32>
    %106 = vector.shape_cast %105 : vector<1x1x288xf32> to vector<288xf32>
    %c21 = arith.constant 21 : index
    %c0_84 = arith.constant 0 : index
    %107 = vector.load %arg6[%c21, %c0_84] : memref<36x288xf32, #tpu.memory_space<vmem>>, vector<1x288xf32>
    %108 = vector.shape_cast %107 : vector<1x288xf32> to vector<288xf32>
    %109 = vector.shape_cast %106 : vector<288xf32> to vector<1x288xf32>
    tpu.vector_store %arg6[%c21, %c0_84], %109 {strides = array<i32>} : memref<36x288xf32, #tpu.memory_space<vmem>>, vector<1x288xf32>,
    %c0_85 = arith.constant 0 : index
    %c2_86 = arith.constant 2 : index
    %c19_87 = arith.constant 19 : index
    %110 = vector.load %arg2[%c0_85, %c2_86, %c19_87] : memref<1x4x342xf32, #tpu.memory_space<vmem>>, vector<1x1x288xf32>
    %111 = vector.shape_cast %110 : vector<1x1x288xf32> to vector<288xf32>
    %c22 = arith.constant 22 : index
    %c0_88 = arith.constant 0 : index
    %112 = vector.load %arg6[%c22, %c0_88] : memref<36x288xf32, #tpu.memory_space<vmem>>, vector<1x288xf32>
    %113 = vector.shape_cast %112 : vector<1x288xf32> to vector<288xf32>
    %114 = vector.shape_cast %111 : vector<288xf32> to vector<1x288xf32>
    tpu.vector_store %arg6[%c22, %c0_88], %114 {strides = array<i32>} : memref<36x288xf32, #tpu.memory_space<vmem>>, vector<1x288xf32>,
    %c0_89 = arith.constant 0 : index
    %c2_90 = arith.constant 2 : index
    %c20_91 = arith.constant 20 : index
    %115 = vector.load %arg2[%c0_89, %c2_90, %c20_91] : memref<1x4x342xf32, #tpu.memory_space<vmem>>, vector<1x1x288xf32>
    %116 = vector.shape_cast %115 : vector<1x1x288xf32> to vector<288xf32>
    %c23 = arith.constant 23 : index
    %c0_92 = arith.constant 0 : index
    %117 = vector.load %arg6[%c23, %c0_92] : memref<36x288xf32, #tpu.memory_space<vmem>>, vector<1x288xf32>
    %118 = vector.shape_cast %117 : vector<1x288xf32> to vector<288xf32>
    %119 = vector.shape_cast %116 : vector<288xf32> to vector<1x288xf32>
    tpu.vector_store %arg6[%c23, %c0_92], %119 {strides = array<i32>} : memref<36x288xf32, #tpu.memory_space<vmem>>, vector<1x288xf32>,
    %c0_93 = arith.constant 0 : index
    %c2_94 = arith.constant 2 : index
    %c36_95 = arith.constant 36 : index
    %120 = vector.load %arg2[%c0_93, %c2_94, %c36_95] : memref<1x4x342xf32, #tpu.memory_space<vmem>>, vector<1x1x288xf32>
    %121 = vector.shape_cast %120 : vector<1x1x288xf32> to vector<288xf32>
    %c24 = arith.constant 24 : index
    %c0_96 = arith.constant 0 : index
    %122 = vector.load %arg6[%c24, %c0_96] : memref<36x288xf32, #tpu.memory_space<vmem>>, vector<1x288xf32>
    %123 = vector.shape_cast %122 : vector<1x288xf32> to vector<288xf32>
    %124 = vector.shape_cast %121 : vector<288xf32> to vector<1x288xf32>
    tpu.vector_store %arg6[%c24, %c0_96], %124 {strides = array<i32>} : memref<36x288xf32, #tpu.memory_space<vmem>>, vector<1x288xf32>,
    %c0_97 = arith.constant 0 : index
    %c2_98 = arith.constant 2 : index
    %c37_99 = arith.constant 37 : index
    %125 = vector.load %arg2[%c0_97, %c2_98, %c37_99] : memref<1x4x342xf32, #tpu.memory_space<vmem>>, vector<1x1x288xf32>
    %126 = vector.shape_cast %125 : vector<1x1x288xf32> to vector<288xf32>
    %c25 = arith.constant 25 : index
    %c0_100 = arith.constant 0 : index
    %127 = vector.load %arg6[%c25, %c0_100] : memref<36x288xf32, #tpu.memory_space<vmem>>, vector<1x288xf32>
    %128 = vector.shape_cast %127 : vector<1x288xf32> to vector<288xf32>
    %129 = vector.shape_cast %126 : vector<288xf32> to vector<1x288xf32>
    tpu.vector_store %arg6[%c25, %c0_100], %129 {strides = array<i32>} : memref<36x288xf32, #tpu.memory_space<vmem>>, vector<1x288xf32>,
    %c0_101 = arith.constant 0 : index
    %c2_102 = arith.constant 2 : index
    %c38_103 = arith.constant 38 : index
    %130 = vector.load %arg2[%c0_101, %c2_102, %c38_103] : memref<1x4x342xf32, #tpu.memory_space<vmem>>, vector<1x1x288xf32>
    %131 = vector.shape_cast %130 : vector<1x1x288xf32> to vector<288xf32>
    %c26 = arith.constant 26 : index
    %c0_104 = arith.constant 0 : index
    %132 = vector.load %arg6[%c26, %c0_104] : memref<36x288xf32, #tpu.memory_space<vmem>>, vector<1x288xf32>
    %133 = vector.shape_cast %132 : vector<1x288xf32> to vector<288xf32>
    %134 = vector.shape_cast %131 : vector<288xf32> to vector<1x288xf32>
    tpu.vector_store %arg6[%c26, %c0_104], %134 {strides = array<i32>} : memref<36x288xf32, #tpu.memory_space<vmem>>, vector<1x288xf32>,
    %c0_105 = arith.constant 0 : index
    %c3_106 = arith.constant 3 : index
    %c0_107 = arith.constant 0 : index
    %135 = vector.load %arg2[%c0_105, %c3_106, %c0_107] : memref<1x4x342xf32, #tpu.memory_space<vmem>>, vector<1x1x288xf32>
    %136 = vector.shape_cast %135 : vector<1x1x288xf32> to vector<288xf32>
    %c27 = arith.constant 27 : index
    %c0_108 = arith.constant 0 : index
    %137 = vector.load %arg6[%c27, %c0_108] : memref<36x288xf32, #tpu.memory_space<vmem>>, vector<1x288xf32>
    %138 = vector.shape_cast %137 : vector<1x288xf32> to vector<288xf32>
    %139 = vector.shape_cast %136 : vector<288xf32> to vector<1x288xf32>
    tpu.vector_store %arg6[%c27, %c0_108], %139 {strides = array<i32>} : memref<36x288xf32, #tpu.memory_space<vmem>>, vector<1x288xf32>,
    %c0_109 = arith.constant 0 : index
    %c3_110 = arith.constant 3 : index
    %c1_111 = arith.constant 1 : index
    %140 = vector.load %arg2[%c0_109, %c3_110, %c1_111] : memref<1x4x342xf32, #tpu.memory_space<vmem>>, vector<1x1x288xf32>
    %141 = vector.shape_cast %140 : vector<1x1x288xf32> to vector<288xf32>
    %c28 = arith.constant 28 : index
    %c0_112 = arith.constant 0 : index
    %142 = vector.load %arg6[%c28, %c0_112] : memref<36x288xf32, #tpu.memory_space<vmem>>, vector<1x288xf32>
    %143 = vector.shape_cast %142 : vector<1x288xf32> to vector<288xf32>
    %144 = vector.shape_cast %141 : vector<288xf32> to vector<1x288xf32>
    tpu.vector_store %arg6[%c28, %c0_112], %144 {strides = array<i32>} : memref<36x288xf32, #tpu.memory_space<vmem>>, vector<1x288xf32>,
    %c0_113 = arith.constant 0 : index
    %c3_114 = arith.constant 3 : index
    %c2_115 = arith.constant 2 : index
    %145 = vector.load %arg2[%c0_113, %c3_114, %c2_115] : memref<1x4x342xf32, #tpu.memory_space<vmem>>, vector<1x1x288xf32>
    %146 = vector.shape_cast %145 : vector<1x1x288xf32> to vector<288xf32>
    %c29 = arith.constant 29 : index
    %c0_116 = arith.constant 0 : index
    %147 = vector.load %arg6[%c29, %c0_116] : memref<36x288xf32, #tpu.memory_space<vmem>>, vector<1x288xf32>
    %148 = vector.shape_cast %147 : vector<1x288xf32> to vector<288xf32>
    %149 = vector.shape_cast %146 : vector<288xf32> to vector<1x288xf32>
    tpu.vector_store %arg6[%c29, %c0_116], %149 {strides = array<i32>} : memref<36x288xf32, #tpu.memory_space<vmem>>, vector<1x288xf32>,
    %c0_117 = arith.constant 0 : index
    %c3_118 = arith.constant 3 : index
    %c18_119 = arith.constant 18 : index
    %150 = vector.load %arg2[%c0_117, %c3_118, %c18_119] : memref<1x4x342xf32, #tpu.memory_space<vmem>>, vector<1x1x288xf32>
    %151 = vector.shape_cast %150 : vector<1x1x288xf32> to vector<288xf32>
    %c30 = arith.constant 30 : index
    %c0_120 = arith.constant 0 : index
    %152 = vector.load %arg6[%c30, %c0_120] : memref<36x288xf32, #tpu.memory_space<vmem>>, vector<1x288xf32>
    %153 = vector.shape_cast %152 : vector<1x288xf32> to vector<288xf32>
    %154 = vector.shape_cast %151 : vector<288xf32> to vector<1x288xf32>
    tpu.vector_store %arg6[%c30, %c0_120], %154 {strides = array<i32>} : memref<36x288xf32, #tpu.memory_space<vmem>>, vector<1x288xf32>,
    %c0_121 = arith.constant 0 : index
    %c3_122 = arith.constant 3 : index
    %c19_123 = arith.constant 19 : index
    %155 = vector.load %arg2[%c0_121, %c3_122, %c19_123] : memref<1x4x342xf32, #tpu.memory_space<vmem>>, vector<1x1x288xf32>
    %156 = vector.shape_cast %155 : vector<1x1x288xf32> to vector<288xf32>
    %c31 = arith.constant 31 : index
    %c0_124 = arith.constant 0 : index
    %157 = vector.load %arg6[%c31, %c0_124] : memref<36x288xf32, #tpu.memory_space<vmem>>, vector<1x288xf32>
    %158 = vector.shape_cast %157 : vector<1x288xf32> to vector<288xf32>
    %159 = vector.shape_cast %156 : vector<288xf32> to vector<1x288xf32>
    tpu.vector_store %arg6[%c31, %c0_124], %159 {strides = array<i32>} : memref<36x288xf32, #tpu.memory_space<vmem>>, vector<1x288xf32>,
    %c0_125 = arith.constant 0 : index
    %c3_126 = arith.constant 3 : index
    %c20_127 = arith.constant 20 : index
    %160 = vector.load %arg2[%c0_125, %c3_126, %c20_127] : memref<1x4x342xf32, #tpu.memory_space<vmem>>, vector<1x1x288xf32>
    %161 = vector.shape_cast %160 : vector<1x1x288xf32> to vector<288xf32>
    %c32 = arith.constant 32 : index
    %c0_128 = arith.constant 0 : index
    %162 = vector.load %arg6[%c32, %c0_128] : memref<36x288xf32, #tpu.memory_space<vmem>>, vector<1x288xf32>
    %163 = vector.shape_cast %162 : vector<1x288xf32> to vector<288xf32>
    %164 = vector.shape_cast %161 : vector<288xf32> to vector<1x288xf32>
    tpu.vector_store %arg6[%c32, %c0_128], %164 {strides = array<i32>} : memref<36x288xf32, #tpu.memory_space<vmem>>, vector<1x288xf32>,
    %c0_129 = arith.constant 0 : index
    %c3_130 = arith.constant 3 : index
    %c36_131 = arith.constant 36 : index
    %165 = vector.load %arg2[%c0_129, %c3_130, %c36_131] : memref<1x4x342xf32, #tpu.memory_space<vmem>>, vector<1x1x288xf32>
    %166 = vector.shape_cast %165 : vector<1x1x288xf32> to vector<288xf32>
    %c33 = arith.constant 33 : index
    %c0_132 = arith.constant 0 : index
    %167 = vector.load %arg6[%c33, %c0_132] : memref<36x288xf32, #tpu.memory_space<vmem>>, vector<1x288xf32>
    %168 = vector.shape_cast %167 : vector<1x288xf32> to vector<288xf32>
    %169 = vector.shape_cast %166 : vector<288xf32> to vector<1x288xf32>
    tpu.vector_store %arg6[%c33, %c0_132], %169 {strides = array<i32>} : memref<36x288xf32, #tpu.memory_space<vmem>>, vector<1x288xf32>,
    %c0_133 = arith.constant 0 : index
    %c3_134 = arith.constant 3 : index
    %c37_135 = arith.constant 37 : index
    %170 = vector.load %arg2[%c0_133, %c3_134, %c37_135] : memref<1x4x342xf32, #tpu.memory_space<vmem>>, vector<1x1x288xf32>
    %171 = vector.shape_cast %170 : vector<1x1x288xf32> to vector<288xf32>
    %c34 = arith.constant 34 : index
    %c0_136 = arith.constant 0 : index
    %172 = vector.load %arg6[%c34, %c0_136] : memref<36x288xf32, #tpu.memory_space<vmem>>, vector<1x288xf32>
    %173 = vector.shape_cast %172 : vector<1x288xf32> to vector<288xf32>
    %174 = vector.shape_cast %171 : vector<288xf32> to vector<1x288xf32>
    tpu.vector_store %arg6[%c34, %c0_136], %174 {strides = array<i32>} : memref<36x288xf32, #tpu.memory_space<vmem>>, vector<1x288xf32>,
    %c0_137 = arith.constant 0 : index
    %c3_138 = arith.constant 3 : index
    %c38_139 = arith.constant 38 : index
    %175 = vector.load %arg2[%c0_137, %c3_138, %c38_139] : memref<1x4x342xf32, #tpu.memory_space<vmem>>, vector<1x1x288xf32>
    %176 = vector.shape_cast %175 : vector<1x1x288xf32> to vector<288xf32>
    %c35 = arith.constant 35 : index
    %c0_140 = arith.constant 0 : index
    %177 = vector.load %arg6[%c35, %c0_140] : memref<36x288xf32, #tpu.memory_space<vmem>>, vector<1x288xf32>
    %178 = vector.shape_cast %177 : vector<1x288xf32> to vector<288xf32>
    %179 = vector.shape_cast %176 : vector<288xf32> to vector<1x288xf32>
    tpu.vector_store %arg6[%c35, %c0_140], %179 {strides = array<i32>} : memref<36x288xf32, #tpu.memory_space<vmem>>, vector<1x288xf32>,
    %c0_141 = arith.constant 0 : index
    %c0_142 = arith.constant 0 : index
    %180 = vector.load %arg3[%c0_141, %c0_142] : memref<8x36xf32, #tpu.memory_space<vmem>>, vector<8x36xf32>
    %c0_143 = arith.constant 0 : index
    %c0_144 = arith.constant 0 : index
    %181 = vector.load %arg6[%c0_143, %c0_144] : memref<36x288xf32, #tpu.memory_space<vmem>>, vector<36x288xf32>
    %cst = arith.constant dense<0.000000e+00> : vector<8x288xf32>
    %182 = tpu.matmul %180, %181, %cst {dimension_numbers = #tpu.dot_dimension_numbers<[1], [0], [0], [1], [0, 0, 1, 1], [], []>} : vector<8x36xf32>, vector<36x288xf32>, vector<8x288xf32> -> vector<8x288xf32>
    %c0_145 = arith.constant 0 : index
    %c0_146 = arith.constant 0 : index
    %183 = vector.load %arg4[%c0_145, %c0_146] : memref<8x1xf32, #tpu.memory_space<vmem>>, vector<8x1xf32>
    %184 = vector.broadcast %183 : vector<8x1xf32> to vector<8x288xf32>
    %185 = arith.addf %182, %184 : vector<8x288xf32>
    %cst_147 = arith.constant 0.000000e+00 : f32
    %186 = vector.broadcast %cst_147 : f32 to vector<8x288xf32>
    %187 = arith.maximumf %185, %186 : vector<8x288xf32>
    %c0_148 = arith.constant 0 : index
    %c0_149 = arith.constant 0 : index
    %c0_150 = arith.constant 0 : index
    %188 = vector.load %arg5[%c0_148, %c0_149, %c0_150] : memref<1x8x288xf32, #tpu.memory_space<vmem>>, vector<1x8x288xf32>
    %189 = vector.shape_cast %188 : vector<1x8x288xf32> to vector<8x288xf32>
    %190 = vector.shape_cast %187 : vector<8x288xf32> to vector<1x8x288xf32>
    tpu.vector_store %arg5[%c0_148, %c0_149, %c0_150], %190 {strides = array<i32>} : memref<1x8x288xf32, #tpu.memory_space<vmem>>, vector<1x8x288xf32>,
    return
  }
  func.func @transform_0(%arg0: i32, %arg1: i32) -> (i32, i32, i32) {
    %c0_i32 = arith.constant 0 : i32
    %c0_i32_0 = arith.constant 0 : i32
    %c0_i32_1 = arith.constant 0 : i32
    return %arg0, %c0_i32, %c0_i32_0 : i32, i32, i32
  }
  func.func @transform_1(%arg0: i32, %arg1: i32) -> (i32, i32) {
    %c0_i32 = arith.constant 0 : i32
    %c0_i32_0 = arith.constant 0 : i32
    %c0_i32_1 = arith.constant 0 : i32
    return %c0_i32, %c0_i32_0 : i32, i32
  }
  func.func @transform_2(%arg0: i32, %arg1: i32) -> (i32, i32) {
    %c0_i32 = arith.constant 0 : i32
    %c0_i32_0 = arith.constant 0 : i32
    %c0_i32_1 = arith.constant 0 : i32
    return %c0_i32, %c0_i32_0 : i32, i32
  }
  func.func @transform_3(%arg0: i32, %arg1: i32) -> (i32, i32, i32) {
    %c0_i32 = arith.constant 0 : i32
    %c0_i32_0 = arith.constant 0 : i32
    return %arg0, %c0_i32, %arg1 : i32, i32, i32
  }
}

</mosaic_0001>

<llo_original>
// kernel: tpu_custom_call.1
$region0: #{tpu_custom_call.1}
  #allocation0 [shape = 'u32[]', space=smem, size = 0x4, offset = 0x4, fixed_abs, tag = 'smem constant byte address 0x4 - core index']
  #allocation1 [shape = 'u32[144,128]{1,0:T(1,128)}', space=vmem, size = 0x12000, scoped, tag = 'internal scratch']
  #allocation2 [shape = 'f32[36,288]{1,0:T(8,128)}', space=vmem, size = 0xf000, scoped, tag = 'scratch operand']
  %s0 = inlined_call_operand.hbm [shape: f32[2,4,342], index: 0, kind: input, shape index: {}]
  %s1 = inlined_call_operand.vmem [shape: f32[8,36], index: 1, kind: input, shape index: {}]
  %s2 = inlined_call_operand.vmem [shape: f32[8,1], index: 2, kind: input, shape index: {}]
  %s3 = inlined_call_operand.hbm [shape: f32[2,8,288], index: 3, kind: output, shape index: {}]
  %s4 = sld [smem:[#allocation0]]
  $region49: #{tpu_custom_call.1} parent=0
    _
  %s6 = ssub.s32 1, %s4
  %s7 = scalar_select 0, %s6, %s4
  $region1: #{tpu_custom_call.1} parent=0
    #allocation3 [shape = 'u8[12288]{0}', space=vmem, size = 0x3000, scoped, tag = 'input window, operand 0']
    #allocation4 [shape = 's32[2]{0}', space=sflag, size = 0x8, scoped, tag = 'scoped memory for tpu_custom_call.1']
    #allocation5 [shape = 's32[2]{0}', space=sflag, size = 0x8, scoped, tag = 'scoped memory for tpu_custom_call.1']
    #allocation6 [shape = 'u8[24576]{0}', space=vmem, size = 0x6000, scoped, tag = 'output window, operand 0']
    %8 = vsyncpa [#allocation4], 0
    %s9 = scalar_lea.sflag [#allocation4], 1
    %10 = vsyncpa %s9, 0
    %11 = vsyncpa [#allocation5], 0
    %s12 = scalar_lea.sflag [#allocation5], 1
    %13 = vsyncpa %s12, 0
    loop: start=0, step=1, limit=4
    $region2: #{tpu_custom_call.1} parent=1 // loop_pre_header
      _
    $region3: #{tpu_custom_call.1} parent=1 // loop_header
      %s15 = sphi 0, %s19
      %p16 = scmp.ge.s32.totalorder %s15, 4
      %s22 = sphi 0, %s34
      %s23 = sphi 0, %s30
      %s24 = sphi 0, %s22
      %s25 = sphi 0, %s23
      %s26 = sphi 0, %s24
      %s27 = sphi 0, %s25
      %s37 = sphi 0, %s39
      %s40 = sphi 0, %s37
      %s41 = sphi 0, %s40
      %s57 = sphi 0, %s41
      %s61 = sphi 0, %s61
      %s63 = sphi 0, %s61
      %s64 = sphi 0, %s63
      %s78 = sphi 0, %s64
      %s82 = sphi 0, %s82
      %s84 = sphi 0, %s82
      %s85 = sphi 0, %s84
      %s99 = sphi 0, %s85
      %s107 = sphi 0, %s109
      %s110 = sphi 0, %s107
      %s111 = sphi 0, %s110
      %s127 = sphi 0, %s111
    $region4: #{tpu_custom_call.1} parent=1 // loop_header_branch
      %18 = sbr.rel (%p16) target = $region8
    $region5: #{tpu_custom_call.1} parent=1 // loop_body
      %s20 = ssub.s32 %s15, 1
      %s21 = ssub.s32 %s15, 2
      %s28 = sadd.s32 1, %s23
      %p29 = scmp.ge.s32.totalorder %s28, 1
      %s30 = scalar_select %p29, 0, %s28
      %s31 = sadd.s32 1, %s22
      %s32 = scalar_select %p29, %s31, %s22
      %p33 = scmp.ge.s32.totalorder %s32, 2
      %s34 = scalar_select %p33, 0, %s32
      %s35 = ssub.s32 %s22, %s34
      %p36 = scmp.eq.s32.totalorder %s35, 0
      %s38 = sadd.s32 %s37, 1
      %s39 = scalar_select %p36, %s37, %s38
      %p42 = pneg %p36
      %p43 = scmp.eq.s32.totalorder %s15, 1
      %p44 = por %p42, %p43
      %p45 = scmp.ne.s32.totalorder %s37, %s40
      %p46 = scmp.eq.s32.totalorder %s15, 0
      %p47 = por %p45, %p46
      %p48 = scmp.ne.s32.totalorder %s37, %s40
      %p49 = scmp.eq.s32.totalorder %s20, 1
      %p50 = por %p48, %p49
      %p51 = scmp.ne.s32.totalorder %s40, %s41
      %p52 = scmp.eq.s32.totalorder %s20, 0
      %p53 = por %p51, %p52
      %p54 = scmp.ne.s32.totalorder %s40, %s41
      %p55 = scmp.eq.s32.totalorder %s21, 1
      %p56 = por %p54, %p55
      %p58 = scmp.ne.s32.totalorder %s41, %s57
      %p59 = scmp.eq.s32.totalorder %s21, 0
      %p60 = por %p58, %p59
      %s62 = sadd.s32 %s61, 1
      %p65 = scmp.eq.s32.totalorder %s15, 1
      %p66 = scmp.ne.s32.totalorder %s61, %s63
      %p67 = scmp.eq.s32.totalorder %s15, 0
      %p68 = por %p66, %p67
      %p69 = scmp.ne.s32.totalorder %s61, %s63
      %p70 = scmp.eq.s32.totalorder %s20, 1
      %p71 = por %p69, %p70
      %p72 = scmp.ne.s32.totalorder %s63, %s64
      %p73 = scmp.eq.s32.totalorder %s20, 0
      %p74 = por %p72, %p73
      %p75 = scmp.ne.s32.totalorder %s63, %s64
      %p76 = scmp.eq.s32.totalorder %s21, 1
      %p77 = por %p75, %p76
      %p79 = scmp.ne.s32.totalorder %s64, %s78
      %p80 = scmp.eq.s32.totalorder %s21, 0
      %p81 = por %p79, %p80
      %s83 = sadd.s32 %s82, 1
      %p86 = scmp.eq.s32.totalorder %s15, 1
      %p87 = scmp.ne.s32.totalorder %s82, %s84
      %p88 = scmp.eq.s32.totalorder %s15, 0
      %p89 = por %p87, %p88
      %p90 = scmp.ne.s32.totalorder %s82, %s84
      %p91 = scmp.eq.s32.totalorder %s20, 1
      %p92 = por %p90, %p91
      %p93 = scmp.ne.s32.totalorder %s84, %s85
      %p94 = scmp.eq.s32.totalorder %s20, 0
      %p95 = por %p93, %p94
      %p96 = scmp.ne.s32.totalorder %s84, %s85
      %p97 = scmp.eq.s32.totalorder %s21, 1
      %p98 = por %p96, %p97
      %p100 = scmp.ne.s32.totalorder %s85, %s99
      %p101 = scmp.eq.s32.totalorder %s21, 0
      %p102 = por %p100, %p101
      %s103 = ssub.s32 %s22, %s34
      %s104 = ssub.s32 %s23, %s30
      %s105 = sor.u32 %s103, %s104
      %p106 = scmp.eq.s32.totalorder %s105, 0
      %s108 = sadd.s32 %s107, 1
      %s109 = scalar_select %p106, %s107, %s108
      %p112 = pneg %p106
      %p113 = scmp.eq.s32.totalorder %s15, 1
      %p114 = por %p112, %p113
      %p115 = scmp.ne.s32.totalorder %s107, %s110
      %p116 = scmp.eq.s32.totalorder %s15, 0
      %p117 = por %p115, %p116
      %p118 = scmp.ne.s32.totalorder %s107, %s110
      %p119 = scmp.eq.s32.totalorder %s20, 1
      %p120 = por %p118, %p119
      %p121 = scmp.ne.s32.totalorder %s110, %s111
      %p122 = scmp.eq.s32.totalorder %s20, 0
      %p123 = por %p121, %p122
      %p124 = scmp.ne.s32.totalorder %s110, %s111
      %p125 = scmp.eq.s32.totalorder %s21, 1
      %p126 = por %p124, %p125
      %p128 = scmp.ne.s32.totalorder %s111, %s127
      %p129 = scmp.eq.s32.totalorder %s21, 0
      %p130 = por %p128, %p129
      %p131 = scmp.le.s32.totalorder 1, %s15
      %p132 = scmp.lt.s32.totalorder %s15, 3
      %p133 = pnand %p131, %p132
      %p134 = pneg %p133
      // Predicated region
      $region9: #{tpu_custom_call.1} parent=5 // pred_check
        _
      $region10: #{tpu_custom_call.1} parent=5 // pred_check_branch
        %136 = sbr.rel (%p133) target = $region12
      $region11: #{tpu_custom_call.1} parent=5 // pred_region
        %s137 = ssub.s32 %s15, 1
        // Predicated region
        $region13: #{tpu_custom_call.1} parent=11 // pred_check
          %p138 = pneg %p74
        $region14: #{tpu_custom_call.1} parent=11 // pred_check_branch
          %140 = sbr.rel (%p138) target = $region16
        $region15: #{tpu_custom_call.1} parent=11 // pred_region
          _
        $region16: #{tpu_custom_call.1} parent=11 // pred_fallthru
          _
        // Predicated region
        $region17: #{tpu_custom_call.1} parent=11 // pred_check
          %p141 = pneg %p95
        $region18: #{tpu_custom_call.1} parent=11 // pred_check_branch
          %143 = sbr.rel (%p141) target = $region20
        $region19: #{tpu_custom_call.1} parent=11 // pred_region
          _
        $region20: #{tpu_custom_call.1} parent=11 // pred_fallthru
          _
      $region12: #{tpu_custom_call.1} parent=5 // pred_fallthru
        _
      %p144 = scmp.lt.s32.totalorder %s15, 2
      // Predicated region
      $region21: #{tpu_custom_call.1} parent=5 // pred_check
        %p145 = pneg %p144
      $region22: #{tpu_custom_call.1} parent=5 // pred_check_branch
        %147 = sbr.rel (%p145) target = $region24
      $region23: #{tpu_custom_call.1} parent=5 // pred_region
        // Predicated region
        $region25: #{tpu_custom_call.1} parent=23 // pred_check
          %p148 = pneg %p47
        $region26: #{tpu_custom_call.1} parent=23 // pred_check_branch
          %150 = sbr.rel (%p148) target = $region28
        $region27: #{tpu_custom_call.1} parent=23 // pred_region
          %s151 = sand.u32 %s37, 1
          %s152 = scalar_lea.sflag [#allocation4], %s151
          %s153 = sand.u32 %s37, 1
          %s154 = smul.addr %s153, 12
          %s155 = scalar_lea.vmem [#allocation3], %s154
          %s157 = ssub.s32 192, 192
          %158 = vsyncadd %s152, %s157
          %s159 = smul.addr %s22, 3
          %s160 = smul.addr %s159, 64
          %s161 = scalar_lea.hbm %s0, %s160
          %s163 = sshll.u32 %s155, 4
          %s164 = int_to_ptr.vmem [resolvable:$true] %s163
          %166 = dma.hbm_to_vmem [thread:$0]  %s161, 192, %s164, %s152
        $region28: #{tpu_custom_call.1} parent=23 // pred_fallthru
          _
      $region24: #{tpu_custom_call.1} parent=5 // pred_fallthru
        _
      %p167 = scmp.le.s32.totalorder 1, %s15
      %p168 = scmp.lt.s32.totalorder %s15, 3
      %p169 = pnand %p167, %p168
      %p170 = pneg %p169
      // Predicated region
      $region29: #{tpu_custom_call.1} parent=5 // pred_check
        _
      $region30: #{tpu_custom_call.1} parent=5 // pred_check_branch
        %172 = sbr.rel (%p169) target = $region32
      $region31: #{tpu_custom_call.1} parent=5 // pred_region
        %s173 = ssub.s32 %s15, 1
        %s174 = sand.u32 %s40, 1
        %s175 = scalar_lea.sflag [#allocation4], %s174
        %s176 = sand.u32 %s40, 1
        %s177 = smul.addr %s176, 12
        %s178 = scalar_lea.vmem [#allocation3], %s177
        // Predicated region
        $region33: #{tpu_custom_call.1} parent=31 // pred_check
          %p179 = pneg %p53
        $region34: #{tpu_custom_call.1} parent=31 // pred_check_branch
          %181 = sbr.rel (%p179) target = $region36
        $region35: #{tpu_custom_call.1} parent=31 // pred_region
          %182 = dma.done %s175, 192
        $region36: #{tpu_custom_call.1} parent=31 // pred_fallthru
          _
        %s183 = sand.u32 %s40, 1
        %s184 = scalar_lea.sflag [#allocation4], %s183
        %s185 = sand.u32 %s40, 1
        %s186 = smul.addr %s185, 12
        %s187 = scalar_lea.vmem [#allocation3], %s186
        %p188 = pneg %p53
        %p189 = pneg %p50
        %p190 = pneg %p74
        %p191 = pneg %p71
        %p192 = pneg %p95
        %p193 = pneg %p92
        %p194 = pneg %p123
        %p195 = pneg %p120
        %s196 = sand.u32 %s110, 1
        %s197 = scalar_lea.sflag [#allocation5], %s196
        %s198 = sand.u32 %s110, 1
        %s199 = smul.addr %s198, 24
        %s200 = scalar_lea.vmem [#allocation6], %s199
        %s201 = smul.u32 3, %s25
        %v202 = vld [vmem:[%s178] ss:$4 sm:$0x7]
        %v203 = vlaneseq
        %vm204 = vcmp.ge.s32.totalorder %v203, 0
        %vm205 = vcmp.lt.s32.totalorder %v203, 288
        %vm206 = vmand %vm204, %vm205
        %207 = vst.msk [vmem:[#allocation2] ss:$8 sm:$0x7] %vm206, %v202
        %208 = vst.msk [vmem:[#allocation2] ss:$8 sm:$0x0] %vm206, %v202
        %v209 = vld [vmem:[%s178] ss:$4 sm:$0x7]
        %211 = vrot.lane.b32.xlu0 %v209, 127
        %v212 = vpop.permute.xlu0 %211
        %v213 = vrot.slane %v212, 1
        %vm214 = vcmask 1039360
        %v215 = vsel %vm214, %v212, %v213
        %s217 = scalar_lea.vmem [#allocation2], 1
        %218 = vst.msk [vmem:[%s217] ss:$8 sm:$0x7] %vm206, %v215
        %219 = vst.msk [vmem:[%s217] ss:$8 sm:$0x0] %vm206, %v215
        %v220 = vld [vmem:[%s178] ss:$4 sm:$0x7]
        %222 = vrot.lane.b32.xlu0 %v220, 126
        %v223 = vpop.permute.xlu0 %222
        %v224 = vrot.slane %v223, 1
        %vm225 = vcmask 1031168
        %v226 = vsel %vm225, %v223, %v224
        %s228 = scalar_lea.vmem [#allocation2], 2
        %229 = vst.msk [vmem:[%s228] ss:$8 sm:$0x7] %vm206, %v226
        %230 = vst.msk [vmem:[%s228] ss:$8 sm:$0x0] %vm206, %v226
        %v231 = vld [vmem:[%s178] ss:$4 sm:$0x7]
        %233 = vrot.lane.b32.xlu0 %v231, 110
        %v234 = vpop.permute.xlu0 %233
        %v235 = vrot.slane %v234, 1
        %vm236 = vcmask 900096
        %v237 = vsel %vm236, %v234, %v235
        %s239 = scalar_lea.vmem [#allocation2], 3
        %240 = vst.msk [vmem:[%s239] ss:$8 sm:$0x7] %vm206, %v237
        %241 = vst.msk [vmem:[%s239] ss:$8 sm:$0x0] %vm206, %v237
        %v242 = vld [vmem:[%s178] ss:$4 sm:$0x7]
        %244 = vrot.lane.b32.xlu0 %v242, 109
        %v245 = vpop.permute.xlu0 %244
        %v246 = vrot.slane %v245, 1
        %vm247 = vcmask 891904
        %v248 = vsel %vm247, %v245, %v246
        %s250 = scalar_lea.vmem [#allocation2], 4
        %251 = vst.msk [vmem:[%s250] ss:$8 sm:$0x7] %vm206, %v248
        %252 = vst.msk [vmem:[%s250] ss:$8 sm:$0x0] %vm206, %v248
        %v253 = vld [vmem:[%s178] ss:$4 sm:$0x7]
        %255 = vrot.lane.b32.xlu0 %v253, 108
        %v256 = vpop.permute.xlu0 %255
        %v257 = vrot.slane %v256, 1
        %vm258 = vcmask 883712
        %v259 = vsel %vm258, %v256, %v257
        %s261 = scalar_lea.vmem [#allocation2], 5
        %262 = vst.msk [vmem:[%s261] ss:$8 sm:$0x7] %vm206, %v259
        %263 = vst.msk [vmem:[%s261] ss:$8 sm:$0x0] %vm206, %v259
        %v264 = vld [vmem:[%s178] ss:$4 sm:$0x7]
        %266 = vrot.lane.b32.xlu0 %v264, 92
        %v267 = vpop.permute.xlu0 %266
        %v268 = vrot.slane %v267, 1
        %vm269 = vcmask 752640
        %v270 = vsel %vm269, %v267, %v268
        %s272 = scalar_lea.vmem [#allocation2], 6
        %273 = vst.msk [vmem:[%s272] ss:$8 sm:$0x7] %vm206, %v270
        %274 = vst.msk [vmem:[%s272] ss:$8 sm:$0x0] %vm206, %v270
        %v275 = vld [vmem:[%s178] ss:$4 sm:$0x7]
        %277 = vrot.lane.b32.xlu0 %v275, 91
        %v278 = vpop.permute.xlu0 %277
        %v279 = vrot.slane %v278, 1
        %vm280 = vcmask 744448
        %v281 = vsel %vm280, %v278, %v279
        %s283 = scalar_lea.vmem [#allocation2], 7
        %284 = vst.msk [vmem:[%s283] ss:$8 sm:$0x7] %vm206, %v281
        %285 = vst.msk [vmem:[%s283] ss:$8 sm:$0x0] %vm206, %v281
        %v286 = vld [vmem:[%s178] ss:$4 sm:$0x7]
        %288 = vrot.lane.b32.xlu0 %v286, 90
        %v289 = vpop.permute.xlu0 %288
        %v290 = vrot.slane %v289, 1
        %vm291 = vcmask 736256
        %v292 = vsel %vm291, %v289, %v290
        %s294 = scalar_lea.vmem [#allocation2], 24
        %295 = vst.msk [vmem:[%s294] ss:$8 sm:$0x7] %vm206, %v292
        %296 = vst.msk [vmem:[%s294] ss:$8 sm:$0x0] %vm206, %v292
        %s297 = scalar_lea.vmem %s178, 1 [#allocation3]
        %v298 = vld [vmem:[%s297] ss:$4 sm:$0x7]
        %s299 = scalar_lea.vmem [#allocation2], 25
        %300 = vst.msk [vmem:[%s299] ss:$8 sm:$0x7] %vm206, %v298
        %301 = vst.msk [vmem:[%s299] ss:$8 sm:$0x0] %vm206, %v298
        %v302 = vld [vmem:[%s297] ss:$4 sm:$0x7]
        %304 = vrot.lane.b32.xlu0 %v302, 127
        %v305 = vpop.permute.xlu0 %304
        %v306 = vrot.slane %v305, 1
        %v307 = vsel %vm214, %v305, %v306
        %s309 = scalar_lea.vmem [#allocation2], 26
        %310 = vst.msk [vmem:[%s309] ss:$8 sm:$0x7] %vm206, %v307
        %311 = vst.msk [vmem:[%s309] ss:$8 sm:$0x0] %vm206, %v307
        %v312 = vld [vmem:[%s297] ss:$4 sm:$0x7]
        %314 = vrot.lane.b32.xlu0 %v312, 126
        %v315 = vpop.permute.xlu0 %314
        %v316 = vrot.slane %v315, 1
        %v317 = vsel %vm225, %v315, %v316
        %s319 = scalar_lea.vmem [#allocation2], 27
        %320 = vst.msk [vmem:[%s319] ss:$8 sm:$0x7] %vm206, %v317
        %321 = vst.msk [vmem:[%s319] ss:$8 sm:$0x0] %vm206, %v317
        %v322 = vld [vmem:[%s297] ss:$4 sm:$0x7]
        %324 = vrot.lane.b32.xlu0 %v322, 110
        %v325 = vpop.permute.xlu0 %324
        %v326 = vrot.slane %v325, 1
        %v327 = vsel %vm236, %v325, %v326
        %s329 = scalar_lea.vmem [#allocation2], 28
        %330 = vst.msk [vmem:[%s329] ss:$8 sm:$0x7] %vm206, %v327
        %331 = vst.msk [vmem:[%s329] ss:$8 sm:$0x0] %vm206, %v327
        %v332 = vld [vmem:[%s297] ss:$4 sm:$0x7]
        %334 = vrot.lane.b32.xlu0 %v332, 109
        %v335 = vpop.permute.xlu0 %334
        %v336 = vrot.slane %v335, 1
        %v337 = vsel %vm247, %v335, %v336
        %s339 = scalar_lea.vmem [#allocation2], 29
        %340 = vst.msk [vmem:[%s339] ss:$8 sm:$0x7] %vm206, %v337
        %341 = vst.msk [vmem:[%s339] ss:$8 sm:$0x0] %vm206, %v337
        %v342 = vld [vmem:[%s297] ss:$4 sm:$0x7]
        %344 = vrot.lane.b32.xlu0 %v342, 108
        %v345 = vpop.permute.xlu0 %344
        %v346 = vrot.slane %v345, 1
        %v347 = vsel %vm258, %v345, %v346
        %s349 = scalar_lea.vmem [#allocation2], 30
        %350 = vst.msk [vmem:[%s349] ss:$8 sm:$0x7] %vm206, %v347
        %351 = vst.msk [vmem:[%s349] ss:$8 sm:$0x0] %vm206, %v347
        %v352 = vld [vmem:[%s297] ss:$4 sm:$0x7]
        %354 = vrot.lane.b32.xlu0 %v352, 92
        %v355 = vpop.permute.xlu0 %354
        %v356 = vrot.slane %v355, 1
        %v357 = vsel %vm269, %v355, %v356
        %s359 = scalar_lea.vmem [#allocation2], 31
        %360 = vst.msk [vmem:[%s359] ss:$8 sm:$0x7] %vm206, %v357
        %361 = vst.msk [vmem:[%s359] ss:$8 sm:$0x0] %vm206, %v357
        %v362 = vld [vmem:[%s297] ss:$4 sm:$0x7]
        %364 = vrot.lane.b32.xlu0 %v362, 91
        %v365 = vpop.permute.xlu0 %364
        %v366 = vrot.slane %v365, 1
        %v367 = vsel %vm280, %v365, %v366
        %s369 = scalar_lea.vmem [#allocation2], 48
        %370 = vst.msk [vmem:[%s369] ss:$8 sm:$0x7] %vm206, %v367
        %371 = vst.msk [vmem:[%s369] ss:$8 sm:$0x0] %vm206, %v367
        %v372 = vld [vmem:[%s297] ss:$4 sm:$0x7]
        %374 = vrot.lane.b32.xlu0 %v372, 90
        %v375 = vpop.permute.xlu0 %374
        %v376 = vrot.slane %v375, 1
        %v377 = vsel %vm291, %v375, %v376
        %s379 = scalar_lea.vmem [#allocation2], 49
        %380 = vst.msk [vmem:[%s379] ss:$8 sm:$0x7] %vm206, %v377
        %381 = vst.msk [vmem:[%s379] ss:$8 sm:$0x0] %vm206, %v377
        %s382 = scalar_lea.vmem %s178, 2 [#allocation3]
        %v383 = vld [vmem:[%s382] ss:$4 sm:$0x7]
        %s384 = scalar_lea.vmem [#allocation2], 50
        %385 = vst.msk [vmem:[%s384] ss:$8 sm:$0x7] %vm206, %v383
        %386 = vst.msk [vmem:[%s384] ss:$8 sm:$0x0] %vm206, %v383
        %v387 = vld [vmem:[%s382] ss:$4 sm:$0x7]
        %389 = vrot.lane.b32.xlu0 %v387, 127
        %v390 = vpop.permute.xlu0 %389
        %v391 = vrot.slane %v390, 1
        %v392 = vsel %vm214, %v390, %v391
        %s394 = scalar_lea.vmem [#allocation2], 51
        %395 = vst.msk [vmem:[%s394] ss:$8 sm:$0x7] %vm206, %v392
        %396 = vst.msk [vmem:[%s394] ss:$8 sm:$0x0] %vm206, %v392
        %v397 = vld [vmem:[%s382] ss:$4 sm:$0x7]
        %399 = vrot.lane.b32.xlu0 %v397, 126
        %v400 = vpop.permute.xlu0 %399
        %v401 = vrot.slane %v400, 1
        %v402 = vsel %vm225, %v400, %v401
        %s404 = scalar_lea.vmem [#allocation2], 52
        %405 = vst.msk [vmem:[%s404] ss:$8 sm:$0x7] %vm206, %v402
        %406 = vst.msk [vmem:[%s404] ss:$8 sm:$0x0] %vm206, %v402
        %v407 = vld [vmem:[%s382] ss:$4 sm:$0x7]
        %409 = vrot.lane.b32.xlu0 %v407, 110
        %v410 = vpop.permute.xlu0 %409
        %v411 = vrot.slane %v410, 1
        %v412 = vsel %vm236, %v410, %v411
        %s414 = scalar_lea.vmem [#allocation2], 53
        %415 = vst.msk [vmem:[%s414] ss:$8 sm:$0x7] %vm206, %v412
        %416 = vst.msk [vmem:[%s414] ss:$8 sm:$0x0] %vm206, %v412
        %v417 = vld [vmem:[%s382] ss:$4 sm:$0x7]
        %419 = vrot.lane.b32.xlu0 %v417, 109
        %v420 = vpop.permute.xlu0 %419
        %v421 = vrot.slane %v420, 1
        %v422 = vsel %vm247, %v420, %v421
        %s424 = scalar_lea.vmem [#allocation2], 54
        %425 = vst.msk [vmem:[%s424] ss:$8 sm:$0x7] %vm206, %v422
        %426 = vst.msk [vmem:[%s424] ss:$8 sm:$0x0] %vm206, %v422
        %v427 = vld [vmem:[%s382] ss:$4 sm:$0x7]
        %429 = vrot.lane.b32.xlu0 %v427, 108
        %v430 = vpop.permute.xlu0 %429
        %v431 = vrot.slane %v430, 1
        %v432 = vsel %vm258, %v430, %v431
        %s434 = scalar_lea.vmem [#allocation2], 55
        %435 = vst.msk [vmem:[%s434] ss:$8 sm:$0x7] %vm206, %v432
        %436 = vst.msk [vmem:[%s434] ss:$8 sm:$0x0] %vm206, %v432
        %v437 = vld [vmem:[%s382] ss:$4 sm:$0x7]
        %439 = vrot.lane.b32.xlu0 %v437, 92
        %v440 = vpop.permute.xlu0 %439
        %v441 = vrot.slane %v440, 1
        %v442 = vsel %vm269, %v440, %v441
        %s444 = scalar_lea.vmem [#allocation2], 72
        %445 = vst.msk [vmem:[%s444] ss:$8 sm:$0x7] %vm206, %v442
        %446 = vst.msk [vmem:[%s444] ss:$8 sm:$0x0] %vm206, %v442
        %v447 = vld [vmem:[%s382] ss:$4 sm:$0x7]
        %449 = vrot.lane.b32.xlu0 %v447, 91
        %v450 = vpop.permute.xlu0 %449
        %v451 = vrot.slane %v450, 1
        %v452 = vsel %vm280, %v450, %v451
        %s454 = scalar_lea.vmem [#allocation2], 73
        %455 = vst.msk [vmem:[%s454] ss:$8 sm:$0x7] %vm206, %v452
        %456 = vst.msk [vmem:[%s454] ss:$8 sm:$0x0] %vm206, %v452
        %v457 = vld [vmem:[%s382] ss:$4 sm:$0x7]
        %459 = vrot.lane.b32.xlu0 %v457, 90
        %v460 = vpop.permute.xlu0 %459
        %v461 = vrot.slane %v460, 1
        %v462 = vsel %vm291, %v460, %v461
        %s464 = scalar_lea.vmem [#allocation2], 74
        %465 = vst.msk [vmem:[%s464] ss:$8 sm:$0x7] %vm206, %v462
        %466 = vst.msk [vmem:[%s464] ss:$8 sm:$0x0] %vm206, %v462
        %s467 = scalar_lea.vmem %s178, 3 [#allocation3]
        %v468 = vld [vmem:[%s467] ss:$4 sm:$0x7]
        %s469 = scalar_lea.vmem [#allocation2], 75
        %470 = vst.msk [vmem:[%s469] ss:$8 sm:$0x7] %vm206, %v468
        %471 = vst.msk [vmem:[%s469] ss:$8 sm:$0x0] %vm206, %v468
        %v472 = vld [vmem:[%s467] ss:$4 sm:$0x7]
        %474 = vrot.lane.b32.xlu0 %v472, 127
        %v475 = vpop.permute.xlu0 %474
        %v476 = vrot.slane %v475, 1
        %v477 = vsel %vm214, %v475, %v476
        %s479 = scalar_lea.vmem [#allocation2], 76
        %480 = vst.msk [vmem:[%s479] ss:$8 sm:$0x7] %vm206, %v477
        %481 = vst.msk [vmem:[%s479] ss:$8 sm:$0x0] %vm206, %v477
        %v482 = vld [vmem:[%s467] ss:$4 sm:$0x7]
        %484 = vrot.lane.b32.xlu0 %v482, 126
        %v485 = vpop.permute.xlu0 %484
        %v486 = vrot.slane %v485, 1
        %v487 = vsel %vm225, %v485, %v486
        %s489 = scalar_lea.vmem [#allocation2], 77
        %490 = vst.msk [vmem:[%s489] ss:$8 sm:$0x7] %vm206, %v487
        %491 = vst.msk [vmem:[%s489] ss:$8 sm:$0x0] %vm206, %v487
        %v492 = vld [vmem:[%s467] ss:$4 sm:$0x7]
        %494 = vrot.lane.b32.xlu0 %v492, 110
        %v495 = vpop.permute.xlu0 %494
        %v496 = vrot.slane %v495, 1
        %v497 = vsel %vm236, %v495, %v496
        %s499 = scalar_lea.vmem [#allocation2], 78
        %500 = vst.msk [vmem:[%s499] ss:$8 sm:$0x7] %vm206, %v497
        %501 = vst.msk [vmem:[%s499] ss:$8 sm:$0x0] %vm206, %v497
        %v502 = vld [vmem:[%s467] ss:$4 sm:$0x7]
        %504 = vrot.lane.b32.xlu0 %v502, 109
        %v505 = vpop.permute.xlu0 %504
        %v506 = vrot.slane %v505, 1
        %v507 = vsel %vm247, %v505, %v506
        %s509 = scalar_lea.vmem [#allocation2], 79
        %510 = vst.msk [vmem:[%s509] ss:$8 sm:$0x7] %vm206, %v507
        %511 = vst.msk [vmem:[%s509] ss:$8 sm:$0x0] %vm206, %v507
        %v512 = vld [vmem:[%s467] ss:$4 sm:$0x7]
        %514 = vrot.lane.b32.xlu0 %v512, 108
        %v515 = vpop.permute.xlu0 %514
        %v516 = vrot.slane %v515, 1
        %v517 = vsel %vm258, %v515, %v516
        %s519 = scalar_lea.vmem [#allocation2], 96
        %520 = vst.msk [vmem:[%s519] ss:$8 sm:$0x7] %vm206, %v517
        %521 = vst.msk [vmem:[%s519] ss:$8 sm:$0x0] %vm206, %v517
        %v522 = vld [vmem:[%s467] ss:$4 sm:$0x7]
        %524 = vrot.lane.b32.xlu0 %v522, 92
        %v525 = vpop.permute.xlu0 %524
        %v526 = vrot.slane %v525, 1
        %v527 = vsel %vm269, %v525, %v526
        %s529 = scalar_lea.vmem [#allocation2], 97
        %530 = vst.msk [vmem:[%s529] ss:$8 sm:$0x7] %vm206, %v527
        %531 = vst.msk [vmem:[%s529] ss:$8 sm:$0x0] %vm206, %v527
        %v532 = vld [vmem:[%s467] ss:$4 sm:$0x7]
        %534 = vrot.lane.b32.xlu0 %v532, 91
        %v535 = vpop.permute.xlu0 %534
        %v536 = vrot.slane %v535, 1
        %v537 = vsel %vm280, %v535, %v536
        %s539 = scalar_lea.vmem [#allocation2], 98
        %540 = vst.msk [vmem:[%s539] ss:$8 sm:$0x7] %vm206, %v537
        %541 = vst.msk [vmem:[%s539] ss:$8 sm:$0x0] %vm206, %v537
        %v542 = vld [vmem:[%s467] ss:$4 sm:$0x7]
        %544 = vrot.lane.b32.xlu0 %v542, 90
        %v545 = vpop.permute.xlu0 %544
        %v546 = vrot.slane %v545, 1
        %v547 = vsel %vm291, %v545, %v546
        %s549 = scalar_lea.vmem [#allocation2], 99
        %550 = vst.msk [vmem:[%s549] ss:$8 sm:$0x7] %vm206, %v547
        %551 = vst.msk [vmem:[%s549] ss:$8 sm:$0x0] %vm206, %v547
        %v552 = vld [vmem:[%s1] sm:$0xff]
        %v553 = vld [vmem:[#allocation2] sm:$0xff]
        %v554 = vld [vmem:[#allocation2 + $0x8] sm:$0xff]
        %v555 = vld [vmem:[#allocation2 + $0x10] sm:$0xff]
        %v556 = vld [vmem:[#allocation2 + $0x18] sm:$0xff]
        %v557 = vld [vmem:[#allocation2 + $0x20] sm:$0xff]
        %v558 = vld [vmem:[#allocation2 + $0x28] sm:$0xff]
        %v559 = vld [vmem:[#allocation2 + $0x30] sm:$0xff]
        %v560 = vld [vmem:[#allocation2 + $0x38] sm:$0xff]
        %v561 = vld [vmem:[#allocation2 + $0x40] sm:$0xff]
        %v562 = vld [vmem:[#allocation2 + $0x48] sm:$0xff]
        %v563 = vld [vmem:[#allocation2 + $0x50] sm:$0xff]
        %v564 = vld [vmem:[#allocation2 + $0x58] sm:$0xff]
        %v565 = vld [vmem:[#allocation2 + $0x60] sm:$0xf]
        %v566 = vld [vmem:[#allocation2 + $0x68] sm:$0xf]
        %v567 = vld [vmem:[#allocation2 + $0x70] sm:$0xf]
        %v568 = vld [vmem:[%s2] sm:$0xff]
        %570 = vset.pattern.permute.xlu0 0
        %571 = vperm.xlu0 %570, %v568
        %v572 = vpop.permute.xlu0 %571
        %vm574 = vcmask 293888
        %v576 = vsel %vm574, %v552, 0
        %vm578 = vcmask 1043456
        %v580 = vsel %vm578, %v565, 0
        %v583 = vsel %vm578, %v566, 0
        %v586 = vsel %vm578, %v567, 0
        %588 = vmatprep.subr.mxu0 %v554
        %589 = vmatpush1.msra.mxu0 %v553
        %590 = vmatprep.subr.mxu0 %v557
        %591 = vmatpush1.msra.mxu0 %v556
        %592 = vmatprep.subr.mxu0 %v560
        %593 = vmatpush1.msra.mxu0 %v559
        %594 = vmatprep.subr.mxu0 %v563
        %595 = vmatpush1.msra.mxu0 %v562
        %596 = vmatprep.subr.mxu0 %v583
        %597 = vmatpush1.msra.mxu0 %v580
        %598 = vmatprep.subr.mxu0 0.0
        %599 = vmatpush1.msra.mxu0 0.0
        %600 = vmatprep.subr.mxu0 0.0
        %601 = vmatpush1.msra.mxu0 0.0
        %602 = vmatprep.subr.mxu0 0.0
        %603 = vmatpush1.msra.mxu0 0.0
        %604 = vmatprep.subr.mxu0 0.0
        %605 = vmatpush1.msra.mxu0 0.0
        %606 = vmatprep.subr.mxu0 0.0
        %607 = vmatpush1.msra.mxu0 0.0
        %608 = vmatprep.subr.mxu0 0.0
        %609 = vmatpush1.msra.mxu0 0.0
        %610 = vmatprep.subr.mxu0 0.0
        %611 = vmatpush1.msra.mxu0 0.0
        %612 = vmatprep.subr.mxu0 0.0
        %613 = vmatpush1.msra.mxu0 0.0
        %614 = vmatprep.subr.mxu0 0.0
        %615 = vmatpush1.msra.mxu0 0.0
        %616 = vmatprep.subr.mxu0 0.0
        %617 = vmatpush1.msra.mxu0 0.0
        %618 = vmatprep.subr.mxu0 0.0
        %619 = vmatpush1.msra.mxu0 0.0
        %620 = vmatprep.subr.mxu0 0.0
        %621 = vmatpush1.msra.mxu0 0.0
        %622 = vmatprep.subr.mxu0 0.0
        %623 = vmatpush1.msra.mxu0 0.0
        %624 = vmatprep.subr.mxu0 0.0
        %625 = vmatpush1.msra.mxu0 0.0
        %626 = vmatprep.subr.mxu0 0.0
        %627 = vmatpush1.msra.mxu0 0.0
        %628 = vmatprep.subr.mxu0 0.0
        %629 = vmatpush1.msra.mxu0 0.0
        %630 = vmatprep.subr.mxu0 0.0
        %631 = vmatpush1.msra.mxu0 0.0
        %632 = vmatprep.subr.mxu0 0.0
        %633 = vmatpush1.msra.mxu0 0.0
        %634 = vmatprep.subr.mxu0 0.0
        %635 = vmatpush1.msra.mxu0 0.0
        %636 = vmatprep.subr.mxu0 0.0
        %637 = vmatpush1.msra.mxu0 0.0
        %638 = vmatprep.subr.mxu0 0.0
        %639 = vmatpush1.msra.mxu0 0.0
        %640 = vmatprep.subr.mxu0 0.0
        %641 = vmatpush1.msra.mxu0 0.0
        %642 = vmatprep.subr.mxu0 0.0
        %643 = vmatpush1.msra.mxu0 0.0
        %644 = vmatprep.subr.mxu0 0.0
        %645 = vmatpush1.msra.mxu0 0.0
        %646 = vmatprep.subr.mxu0 0.0
        %647 = vmatpush1.msra.mxu0 0.0
        %648 = vmatprep.subr.mxu0 0.0
        %649 = vmatpush1.msra.mxu0 0.0
        %650 = vmatprep.subr.mxu0 0.0
        %651 = vmatpush1.msra.mxu0 0.0
        %652 = vmatprep.mubr.f32.mxu0 0.0
        %653 = vmatmul.mubr.f32.gmra.mrb[0].mxu0 %v576
        %v654 = vpop.f32.mrb[0].mxu0
        %v655 = vadd.f32 %v572, %v654
        %v656 = vpop.f32.mrb[0].mxu0
        %v657 = vadd.f32 %v572, %v656
        %658 = vdwg.mxu0
        %659 = vmatprep.subr.mxu0 0.0
        %660 = vmatpush1.msra.mxu0 %v555
        %661 = vmatprep.subr.mxu0 0.0
        %662 = vmatpush1.msra.mxu0 %v558
        %663 = vmatprep.subr.mxu0 0.0
        %664 = vmatpush1.msra.mxu0 %v561
        %665 = vmatprep.subr.mxu0 0.0
        %666 = vmatpush1.msra.mxu0 %v564
        %667 = vmatprep.subr.mxu0 0.0
        %668 = vmatpush1.msra.mxu0 %v586
        %669 = vmatprep.subr.mxu0 0.0
        %670 = vmatpush1.msra.mxu0 0.0
        %671 = vmatprep.subr.mxu0 0.0
        %672 = vmatpush1.msra.mxu0 0.0
        %673 = vmatprep.subr.mxu0 0.0
        %674 = vmatpush1.msra.mxu0 0.0
        %675 = vmatprep.subr.mxu0 0.0
        %676 = vmatpush1.msra.mxu0 0.0
        %677 = vmatprep.subr.mxu0 0.0
        %678 = vmatpush1.msra.mxu0 0.0
        %679 = vmatprep.subr.mxu0 0.0
        %680 = vmatpush1.msra.mxu0 0.0
        %681 = vmatprep.subr.mxu0 0.0
        %682 = vmatpush1.msra.mxu0 0.0
        %683 = vmatprep.subr.mxu0 0.0
        %684 = vmatpush1.msra.mxu0 0.0
        %685 = vmatprep.subr.mxu0 0.0
        %686 = vmatpush1.msra.mxu0 0.0
        %687 = vmatprep.subr.mxu0 0.0
        %688 = vmatpush1.msra.mxu0 0.0
        %689 = vmatprep.subr.mxu0 0.0
        %690 = vmatpush1.msra.mxu0 0.0
        %691 = vmatprep.subr.mxu0 0.0
        %692 = vmatpush1.msra.mxu0 0.0
        %693 = vmatprep.subr.mxu0 0.0
        %694 = vmatpush1.msra.mxu0 0.0
        %695 = vmatprep.subr.mxu0 0.0
        %696 = vmatpush1.msra.mxu0 0.0
        %697 = vmatprep.subr.mxu0 0.0
        %698 = vmatpush1.msra.mxu0 0.0
        %699 = vmatprep.subr.mxu0 0.0
        %700 = vmatpush1.msra.mxu0 0.0
        %701 = vmatprep.subr.mxu0 0.0
        %702 = vmatpush1.msra.mxu0 0.0
        %703 = vmatprep.subr.mxu0 0.0
        %704 = vmatpush1.msra.mxu0 0.0
        %705 = vmatprep.subr.mxu0 0.0
        %706 = vmatpush1.msra.mxu0 0.0
        %707 = vmatprep.subr.mxu0 0.0
        %708 = vmatpush1.msra.mxu0 0.0
        %709 = vmatprep.subr.mxu0 0.0
        %710 = vmatpush1.msra.mxu0 0.0
        %711 = vmatprep.subr.mxu0 0.0
        %712 = vmatpush1.msra.mxu0 0.0
        %713 = vmatprep.subr.mxu0 0.0
        %714 = vmatpush1.msra.mxu0 0.0
        %715 = vmatprep.subr.mxu0 0.0
        %716 = vmatpush1.msra.mxu0 0.0
        %717 = vmatprep.subr.mxu0 0.0
        %718 = vmatpush1.msra.mxu0 0.0
        %719 = vmatprep.subr.mxu0 0.0
        %720 = vmatpush1.msra.mxu0 0.0
        %721 = vmatprep.subr.mxu0 0.0
        %722 = vmatpush1.msra.mxu0 0.0
        %723 = vmatprep.mubr.f32.mxu0 0.0
        %724 = vmatmul.mubr.f32.gmra.mrb[0].mxu0 %v576
        %v725 = vpop.f32.mrb[0].mxu0
        %v726 = vadd.f32 %v572, %v725
        %v727 = vpop.f32.mrb[0].mxu0
        %728 = vdwg.mxu0
        %v729 = vmax.f32 %v655, 0.0
        %v730 = vmax.f32 %v657, 0.0
        %v731 = vmax.f32 %v726, 0.0
        %732 = vst [vmem:[%s200] sm:$0xff] %v729
        %733 = vst [vmem:[%s200 + $0x8] sm:$0xff] %v730
        %vm734 = vcmask 261120
        %735 = vst.msk [vmem:[%s200 + $0x10] sm:$0xff] %vm734, %v731
        %s736 = sand.u32 %s110, 1
        %s737 = scalar_lea.sflag [#allocation5], %s736
        %s738 = sand.u32 %s110, 1
        %s739 = smul.addr %s738, 24
        %s740 = scalar_lea.vmem [#allocation6], %s739
        // Predicated region
        $region37: #{tpu_custom_call.1} parent=31 // pred_check
          %p741 = pneg %p120
        $region38: #{tpu_custom_call.1} parent=31 // pred_check_branch
          %743 = sbr.rel (%p741) target = $region40
        $region39: #{tpu_custom_call.1} parent=31 // pred_region
          %s744 = smul.u32 3, %s25
          %s746 = ssub.s32 384, 384
          %747 = vsyncadd %s737, %s746
          %s748 = smul.addr %s24, 3
          %s749 = sadd.s32 %s744, %s748
          %s750 = smul.addr %s749, 128
          %s751 = scalar_lea.hbm %s3, %s750
          %s753 = sshll.u32 %s740, 4
          %s754 = int_to_ptr.vmem [resolvable:$true] %s753
          %756 = dma.vmem_to_hbm [thread:$0]  %s754, 384, %s751, %s737
        $region40: #{tpu_custom_call.1} parent=31 // pred_fallthru
          _
      $region32: #{tpu_custom_call.1} parent=5 // pred_fallthru
        _
      %p757 = scmp.le.s32.totalorder 2, %s15
      // Predicated region
      $region41: #{tpu_custom_call.1} parent=5 // pred_check
        %p758 = pneg %p757
      $region42: #{tpu_custom_call.1} parent=5 // pred_check_branch
        %760 = sbr.rel (%p758) target = $region44
      $region43: #{tpu_custom_call.1} parent=5 // pred_region
        %s761 = ssub.s32 %s15, 2
        // Predicated region
        $region45: #{tpu_custom_call.1} parent=43 // pred_check
          %p762 = pneg %p126
        $region46: #{tpu_custom_call.1} parent=43 // pred_check_branch
          %764 = sbr.rel (%p762) target = $region48
        $region47: #{tpu_custom_call.1} parent=43 // pred_region
          %s765 = sand.u32 %s111, 1
          %s766 = scalar_lea.sflag [#allocation5], %s765
          %s767 = sand.u32 %s111, 1
          %s768 = smul.addr %s767, 24
          %s769 = scalar_lea.vmem [#allocation6], %s768
          %770 = dma.done %s766, 384
        $region48: #{tpu_custom_call.1} parent=43 // pred_fallthru
          _
      $region44: #{tpu_custom_call.1} parent=5 // pred_fallthru
        _
    $region6: #{tpu_custom_call.1} parent=1 // loop_footer
      %s19 = sadd.s32 1, %s15
    $region7: #{tpu_custom_call.1} parent=1 // loop_footer_branch
      %14 = sbr.rel target = $region3
    $region8: #{tpu_custom_call.1} parent=1 // loop_exit
      _
    %771 = vsyncpa [#allocation4], 1
    %s772 = scalar_lea.sflag [#allocation4], 1
    %773 = vsyncpa %s772, 1
    %774 = vsyncpa [#allocation5], 1
    %s775 = scalar_lea.sflag [#allocation5], 1
    %776 = vsyncpa %s775, 1

</llo_original>
